<compile_context>
chip_gen: v7x
topology: tpu7x:2x2x1
jax: 0.10.0
libtpu: 0.0.40
codegen_flags: <defaults>
</compile_context>

<pallas_src>
import functools
import math

import jax
import jax.numpy as jnp
from jax.experimental import pallas as pl
from jax.experimental.pallas import tpu as pltpu

_MIB = 1024 * 1024
_MIN_SAMPLES_FOR_SAMPLE_GRID = 8   # below this, split G into the fused grid


# --------------------------------------------------------------------------- #
# Kernels
# --------------------------------------------------------------------------- #
def _group_norm_fused_kernel(x_ref, w_ref, b_ref, o_ref, *, eps, inv_count):
    """Single-pass fused GroupNorm for one (sample[, group]) block.

    Blocks: x/o = (1, Gb, R, L), w/b = (Gb, R, 1).  Stats use the one-pass
    E[x^2] - mean^2 form so x is walked once and the output is written
    directly (no centered temporary, no second full-tile pass)."""
    x = x_ref[0].astype(jnp.float32)                              # (Gb, R, L)
    # Per-row lane reductions (XLU) + tiny cross-row reduce.  If a bundle dump
    # ever shows these binding on the 2 XLU units, they can be offloaded to
    # the (idle) MXU via a dot with a ones-vector.
    row_sum = jnp.sum(x, axis=-1, keepdims=True)                  # (Gb, R, 1)
    row_ssq = jnp.sum(x * x, axis=-1, keepdims=True)
    mean = jnp.sum(row_sum, axis=-2, keepdims=True) * inv_count   # (Gb, 1, 1)
    ex2 = jnp.sum(row_ssq, axis=-2, keepdims=True) * inv_count
    var = jnp.maximum(ex2 - mean * mean, 0.0)
    rstd = jax.lax.rsqrt(var + eps)                               # EUP
    w = w_ref[...].astype(jnp.float32)                            # (Gb, R, 1)
    b = b_ref[...].astype(jnp.float32)
    scale = rstd * w                                              # (Gb, R, 1)
    shift = b - mean * scale
    o_ref[0] = (x * scale + shift).astype(o_ref.dtype)


def _group_stats_kernel(x_ref, mean_ref, rstd_ref, *, eps, inv_count):
    """Chunked reduction over rows of one (sample, group): accumulate sum and
    sum-of-squares in the resident (1,1,1,1) output blocks across the
    innermost ("arbitrary") grid axis; finalize to mean / rstd on the last
    chunk."""
    k = pl.program_id(2)

    @pl.when(k == 0)
    def _init():
        mean_ref[...] = jnp.zeros_like(mean_ref)
        rstd_ref[...] = jnp.zeros_like(rstd_ref)

    x = x_ref[0, 0].astype(jnp.float32)                           # (Rc, L)
    row_sum = jnp.sum(x, axis=-1, keepdims=True)                  # (Rc, 1)
    row_ssq = jnp.sum(x * x, axis=-1, keepdims=True)
    mean_ref[0, 0] += jnp.sum(row_sum, axis=-2, keepdims=True)    # (1, 1)
    rstd_ref[0, 0] += jnp.sum(row_ssq, axis=-2, keepdims=True)

    @pl.when(k == pl.num_programs(2) - 1)
    def _finalize():
        mu = mean_ref[0, 0] * inv_count
        var = jnp.maximum(rstd_ref[0, 0] * inv_count - mu * mu, 0.0)
        mean_ref[0, 0] = mu
        rstd_ref[0, 0] = jax.lax.rsqrt(var + eps)


def _group_norm_apply_kernel(x_ref, mean_ref, rstd_ref, w_ref, b_ref, o_ref):
    """Elementwise normalize of one (sample, group, row-chunk) block with
    precomputed per-group statistics."""
    x = x_ref[0, 0].astype(jnp.float32)                           # (Rc, L)
    mean = mean_ref[0, 0]                                         # (1, 1)
    rstd = rstd_ref[0, 0]
    w = w_ref[0].astype(jnp.float32)                              # (Rc, 1)
    b = b_ref[0].astype(jnp.float32)
    scale = rstd * w                                              # (Rc, 1)
    shift = b - mean * scale
    o_ref[0, 0] = (x * scale + shift).astype(o_ref.dtype)


# --------------------------------------------------------------------------- #
# Budgeting helpers (generation-aware, honest VMEM accounting)
# --------------------------------------------------------------------------- #
def _tpu_vmem_capacity_bytes():
    """Physical per-core VMEM, with a conservative (v7x-sized) fallback."""
    try:
        info = pltpu.get_tpu_info()
        for attr in ("vmem_capacity_bytes", "vmem_size_bytes", "vmem_bytes"):
            cap = getattr(info, attr, None)
            if cap:
                return int(cap)
    except Exception:
        pass
    return 64 * _MIB


def _vmem_budgets(vmem_cap):
    """(scoped-VMEM cap, fused working-set threshold, default chunk bytes)."""
    scoped_cap = max(min(vmem_cap * 3 // 4, vmem_cap - 12 * _MIB), 16 * _MIB)
    max_fused = scoped_cap * 4 // 5     # headroom for the 1.25x vmem_limit margin
    # v7x (64 MiB VMEM, 3.2 TB/s HBM): small chunks; v5e/v6e (128 MiB): bigger.
    chunk = 4 * _MIB if vmem_cap <= 64 * _MIB else 8 * _MIB
    return scoped_cap, max_fused, chunk


def _sublane_multiple(itemsize):
    return max(8, 32 // max(1, int(itemsize)))    # 8 f32, 16 bf16, 32 int8/fp8


def _working_set_bytes(Gb, Rb, L, itemsize, *, n_xblocks, with_params):
    """Conservative VMEM bytes live in one grid step: double-buffered x-sized
    streams, in-kernel f32 temporaries, and lane/sublane-padded (Gb,Rb,1)
    parameter buffers plus their f32 casts."""
    blk = Gb * Rb * L
    total = n_xblocks * 2 * blk * itemsize          # double-buffered in/out blocks
    total += 2 * blk * 4                            # f32 cast of x + f32 result temp
    if with_params:
        r_pad = -(-Rb // 8) * 8
        pelems = Gb * r_pad * 128                   # (Gb,Rb,1) pads to 128 lanes
        total += 2 * (2 * pelems * itemsize + pelems * 4)   # w,b bufs + f32 casts
    return total + _MIB                             # slack: stats blocks, semaphores


def _vmem_limit_bytes(working_set, scoped_cap):
    # Default scoped-VMEM limits are ~16 MiB (v5e) / ~32 MiB (v6e, v7x): only
    # raise the cap when the (conservative) working set actually needs it.
    if working_set <= 12 * _MIB:
        return None
    want = max(working_set * 5 // 4, working_set + 2 * _MIB)
    return int(min(want, scoped_cap))


def _compiler_params(dims, working_set, scoped_cap):
    kwargs = dict(dimension_semantics=dims)
    limit = _vmem_limit_bytes(working_set, scoped_cap)
    if limit is not None:
        kwargs["vmem_limit_bytes"] = limit
    return pltpu.CompilerParams(**kwargs)


def _pick_chunk_rows(R, L, itemsize, chunk_bytes):
    """Largest sublane-aligned divisor of R whose chunk (x rows + lane-padded
    per-row params) fits chunk_bytes; falls back to the smallest aligned
    divisor, then to R."""
    sub = _sublane_multiple(itemsize)
    per_row = L * itemsize + 2 * 128 * itemsize     # x row + padded w,b rows
    budget = max(1, int(chunk_bytes) // per_row)
    if budget >= R:
        return R
    for cand in range(min(budget, R), 0, -1):
        if R % cand == 0 and cand % sub == 0:
            return cand
    for cand in range(sub, R + 1, sub):
        if R % cand == 0:
            return cand
    # TODO(synk): R has no sublane-aligned divisor; whole-R blocks (only hit
    # for tiny R, where one full row-set easily fits VMEM anyway).
    return R


# --------------------------------------------------------------------------- #
# Wrappers
# --------------------------------------------------------------------------- #
def _dp_group_norm_fused(xg, w_rows, b_rows, eps, inv_count, *, split_groups,
                         scoped_cap):
    N, G, R, L = xg.shape
    itemsize = jnp.dtype(xg.dtype).itemsize
    kernel = functools.partial(_group_norm_fused_kernel, eps=eps,
                               inv_count=inv_count)
    if split_groups:
        # Small-N: one grid step per (sample, group) so both v7x TensorCores
        # get work and DMA/compute overlap survives N == 1.
        grid = (N, G)
        dims = ("parallel", "parallel")
        x_spec = pl.BlockSpec((1, 1, R, L), lambda n, g: (n, g, 0, 0))
        o_spec = pl.BlockSpec((1, 1, R, L), lambda n, g: (n, g, 0, 0))
        p_spec = pl.BlockSpec((1, R, 1), lambda n, g: (g, 0, 0))
        ws = _working_set_bytes(1, R, L, itemsize, n_xblocks=2, with_params=True)
    else:
        grid = (N,)
        dims = ("parallel",)
        x_spec = pl.BlockSpec((1, G, R, L), lambda n: (n, 0, 0, 0))
        o_spec = pl.BlockSpec((1, G, R, L), lambda n: (n, 0, 0, 0))
        p_spec = pl.BlockSpec((G, R, 1), lambda n: (0, 0, 0))   # VMEM-resident params
        ws = _working_set_bytes(G, R, L, itemsize, n_xblocks=2, with_params=True)
    return pl.pallas_call(
        kernel,
        out_shape=jax.ShapeDtypeStruct(xg.shape, xg.dtype),
        grid=grid,
        in_specs=[x_spec, p_spec, p_spec],
        out_specs=o_spec,
        compiler_params=_compiler_params(dims, ws, scoped_cap),
    )(xg, w_rows, b_rows)


def _dp_group_norm_chunked(xg, w_rows, b_rows, eps, inv_count, *, chunk_bytes,
                           scoped_cap):
    N, G, R, L = xg.shape
    itemsize = jnp.dtype(xg.dtype).itemsize
    Rc = _pick_chunk_rows(R, L, itemsize, chunk_bytes)
    K = R // Rc

    # Pass 1: per-(sample, group) sum / sum-of-squares accumulated in resident
    # output blocks across the innermost ("arbitrary") axis.
    stats_shape = jax.ShapeDtypeStruct((N, G, 1, 1), jnp.float32)
    stats_ws = _working_set_bytes(1, Rc, L, itemsize, n_xblocks=1, with_params=False)
    mean, rstd = pl.pallas_call(
        functools.partial(_group_stats_kernel, eps=eps, inv_count=inv_count),
        out_shape=(stats_shape, stats_shape),
        grid=(N, G, K),
        in_specs=[pl.BlockSpec((1, 1, Rc, L), lambda n, g, k: (n, g, k, 0))],
        out_specs=(
            pl.BlockSpec((1, 1, 1, 1), lambda n, g, k: (n, g, 0, 0)),
            pl.BlockSpec((1, 1, 1, 1), lambda n, g, k: (n, g, 0, 0)),
        ),
        compiler_params=_compiler_params(("parallel", "parallel", "arbitrary"),
                                         stats_ws, scoped_cap),
    )(xg)

    # Pass 2: elementwise normalize with the precomputed statistics.
    apply_ws = _working_set_bytes(1, Rc, L, itemsize, n_xblocks=2, with_params=True)
    return pl.pallas_call(
        _group_norm_apply_kernel,
        out_shape=jax.ShapeDtypeStruct(xg.shape, xg.dtype),
        grid=(N, G, K),
        in_specs=[
            pl.BlockSpec((1, 1, Rc, L), lambda n, g, k: (n, g, k, 0)),
            pl.BlockSpec((1, 1, 1, 1), lambda n, g, k: (n, g, 0, 0)),
            pl.BlockSpec((1, 1, 1, 1), lambda n, g, k: (n, g, 0, 0)),
            pl.BlockSpec((1, Rc, 1), lambda n, g, k: (g, k, 0)),
            pl.BlockSpec((1, Rc, 1), lambda n, g, k: (g, k, 0)),
        ],
        out_specs=pl.BlockSpec((1, 1, Rc, L), lambda n, g, k: (n, g, k, 0)),
        compiler_params=_compiler_params(("parallel", "parallel", "parallel"),
                                         apply_ws, scoped_cap),
    )(xg, mean, rstd, w_rows, b_rows)


def dp_group_norm(x, num_groups, weight=None, bias=None, eps=1e-5, *,
                  max_fused_bytes=None, chunk_bytes=None):
    """GroupNorm forward (F.group_norm semantics).

    x: (N, C, *spatial); weight/bias: (C,) or None (affine=False)."""
    if x.ndim < 2:
        raise ValueError("expected input of shape (N, C, ...)")
    N, C = int(x.shape[0]), int(x.shape[1])
    G = int(num_groups)
    if C % G != 0:
        raise ValueError("num_channels must be divisible by num_groups")
    Cg = C // G
    HW = int(math.prod(x.shape[2:]))
    dtype = x.dtype
    itemsize = jnp.dtype(dtype).itemsize

    if weight is None:   # affine=False
        weight = jnp.ones((C,), dtype=dtype)
    if bias is None:
        bias = jnp.zeros((C,), dtype=dtype)

    vmem_cap = _tpu_vmem_capacity_bytes()
    scoped_cap, default_fused, default_chunk = _vmem_budgets(vmem_cap)
    if max_fused_bytes is None:
        max_fused_bytes = default_fused
    if chunk_bytes is None:
        chunk_bytes = default_chunk

    # Lane-dense fold: zero-pad the spatial axis to a multiple of 128 when
    # needed (stats divide by the TRUE element count; padded tail is sliced
    # off), then pick the widest lane width dividing it.
    x3 = x.reshape(N, C, HW)
    HW_pad = -(-HW // 128) * 128
    if HW_pad != HW:
        x3 = jnp.pad(x3, ((0, 0), (0, 0), (0, HW_pad - HW)))
    L = 128
    for cand in (1024, 512, 256, 128):
        if HW_pad % cand == 0:
            L = cand
            break
    rep = HW_pad // L
    R = Cg * rep
    inv_count = 1.0 / float(Cg * HW)            # true count (padding is zeros)

    xg = x3.reshape(N, G, R, L)                 # free row-major reshape
    w_rows = jnp.repeat(weight, rep).reshape(G, R, 1)   # tiny per-row params
    b_rows = jnp.repeat(bias, rep).reshape(G, R, 1)

    ws_sample = _working_set_bytes(G, R, L, itemsize, n_xblocks=2, with_params=True)
    ws_group = _working_set_bytes(1, R, L, itemsize, n_xblocks=2, with_params=True)
    if N >= _MIN_SAMPLES_FOR_SAMPLE_GRID and ws_sample <= max_fused_bytes:
        out = _dp_group_norm_fused(xg, w_rows, b_rows, eps, inv_count,
                                   split_groups=False, scoped_cap=scoped_cap)
    elif ws_group <= max_fused_bytes:
        out = _dp_group_norm_fused(xg, w_rows, b_rows, eps, inv_count,
                                   split_groups=True, scoped_cap=scoped_cap)
    else:
        out = _dp_group_norm_chunked(xg, w_rows, b_rows, eps, inv_count,
                                     chunk_bytes=chunk_bytes, scoped_cap=scoped_cap)

    out = out.reshape(N, C, HW_pad)
    if HW_pad != HW:
        out = out[:, :, :HW]
    return out.reshape(x.shape)


# --------------------------------------------------------------------------- #
# Reference + self-test
# --------------------------------------------------------------------------- #
def _reference_group_norm(x, num_groups, weight, bias, eps):
    N, C = x.shape[0], x.shape[1]
    xr = x.reshape(N, num_groups, -1).astype(jnp.float32)
    mean = xr.mean(-1, keepdims=True)
    var = ((xr - mean) ** 2).mean(-1, keepdims=True)
    xhat = ((xr - mean) * jax.lax.rsqrt(var + eps)).reshape(x.shape)
    pshape = (1, C) + (1,) * (x.ndim - 2)
    out = xhat * weight.reshape(pshape) + bias.reshape(pshape)
    return out.astype(x.dtype)


if __name__ == "__main__":
    # Module config: DPGroupNorm(num_groups=2, num_channels=4, eps=1e-5, affine=True)
    num_groups = 2
    num_channels = 4
    eps = 1e-5

    key = jax.random.PRNGKey(0)
    keys = jax.random.split(key, 8)

    # 1) reset_parameters(): weight = ones, bias = zeros.  N=2 -> fused path
    #    with the (N, G) grid (small-N / megacore split).
    x = jax.random.normal(keys[0], (2, num_channels, 16, 16), dtype=jnp.float32)
    weight = jnp.ones((num_channels,), dtype=jnp.float32)
    bias = jnp.zeros((num_channels,), dtype=jnp.float32)
    out = jax.block_until_ready(dp_group_norm(x, num_groups, weight, bias, eps=eps))
    ref = _reference_group_norm(x, num_groups, weight, bias, eps)
    assert out.shape == x.shape and out.dtype == x.dtype
    assert jnp.allclose(out, ref, atol=1e-4, rtol=1e-5)

    # 2) Non-trivial affine params, same fused path.
    w2 = jax.random.normal(keys[1], (num_channels,), dtype=jnp.float32)
    b2 = jax.random.normal(keys[2], (num_channels,), dtype=jnp.float32)
    out2 = jax.block_until_ready(dp_group_norm(x, num_groups, w2, b2, eps=eps))
    ref2 = _reference_group_norm(x, num_groups, w2, b2, eps)
    assert jnp.allclose(out2, ref2, atol=1e-4, rtol=1e-5)

    # 3) N >= 8 -> fused whole-sample grid=(N,).
    x4 = jax.random.normal(keys[3], (8, num_channels, 16, 16), dtype=jnp.float32)
    out4 = jax.block_until_ready(dp_group_norm(x4, num_groups, w2, b2, eps=eps))
    ref4 = _reference_group_norm(x4, num_groups, w2, b2, eps)
    assert jnp.allclose(out4, ref4, atol=1e-4, rtol=1e-5)

    # 4) Spatial size not a multiple of 128 -> zero-pad + lane-dense path.
    x5 = jax.random.normal(keys[4], (2, num_channels, 10, 10), dtype=jnp.float32)
    out5 = jax.block_until_ready(dp_group_norm(x5, num_groups, w2, b2, eps=eps))
    ref5 = _reference_group_norm(x5, num_groups, w2, b2, eps)
    assert out5.shape == x5.shape
    assert jnp.allclose(out5, ref5, atol=1e-4, rtol=1e-5)

    # 5) Force the chunked (large-sample / v7x-safe) stats+apply path.
    C3, G3 = 8, 4
    x3 = jax.random.normal(keys[5], (2, C3, 32, 32), dtype=jnp.float32)
    w3 = jax.random.normal(keys[6], (C3,), dtype=jnp.float32)
    b3 = jax.random.normal(keys[7], (C3,), dtype=jnp.float32)
    out3 = jax.block_until_ready(
        dp_group_norm(x3, G3, w3, b3, eps=eps,
                      max_fused_bytes=0, chunk_bytes=16 * 1024))
    ref3 = _reference_group_norm(x3, G3, w3, b3, eps)
    assert out3.shape == x3.shape and out3.dtype == x3.dtype
    assert jnp.allclose(out3, ref3, atol=1e-4, rtol=1e-5)

    print("KERNEL_OK")
</pallas_src>

<mosaic_0001>
module attributes {stable_mosaic.version = 11 : i64} {
  func.func @_group_norm_fused_kernel(%arg0: i32, %arg1: i32, %arg2: memref<1x1x2x256xf32, #tpu.memory_space<vmem>>, %arg3: memref<1x2x1xf32, #tpu.memory_space<vmem>>, %arg4: memref<1x2x1xf32, #tpu.memory_space<vmem>>, %arg5: memref<1x1x2x256xf32, #tpu.memory_space<vmem>>) attributes {dimension_semantics = [#tpu.dimension_semantics<parallel>, #tpu.dimension_semantics<parallel>], iteration_bounds = array<i64: 2, 2>, scalar_prefetch = 0 : i64, scratch_operands = 0 : i64, tpu.core_type = #tpu.core_type<tc>, window_params = [{transform_indices = @transform_0, window_bounds = array<i64: 1, 1, 2, 256>}, {transform_indices = @transform_1, window_bounds = array<i64: 1, 2, 1>}, {transform_indices = @transform_2, window_bounds = array<i64: 1, 2, 1>}, {transform_indices = @transform_3, window_bounds = array<i64: 1, 1, 2, 256>}]} {
    %c0 = arith.constant 0 : index
    %c0_0 = arith.constant 0 : index
    %c0_1 = arith.constant 0 : index
    %c0_2 = arith.constant 0 : index
    %0 = vector.load %arg2[%c0, %c0_0, %c0_1, %c0_2] : memref<1x1x2x256xf32, #tpu.memory_space<vmem>>, vector<1x1x2x256xf32>
    %1 = vector.shape_cast %0 : vector<1x1x2x256xf32> to vector<1x2x256xf32>
    %cst = arith.constant dense<0.000000e+00> : vector<1x2xf32>
    %2 = vector.multi_reduction <add>, %1, %cst [2] : vector<1x2x256xf32> to vector<1x2xf32>
    %3 = vector.shape_cast %2 : vector<1x2xf32> to vector<1x2x1xf32>
    %4 = arith.mulf %1, %1 : vector<1x2x256xf32>
    %cst_3 = arith.constant dense<0.000000e+00> : vector<1x2xf32>
    %5 = vector.multi_reduction <add>, %4, %cst_3 [2] : vector<1x2x256xf32> to vector<1x2xf32>
    %6 = vector.shape_cast %5 : vector<1x2xf32> to vector<1x2x1xf32>
    %cst_4 = arith.constant dense<0.000000e+00> : vector<1x1xf32>
    %7 = vector.multi_reduction <add>, %3, %cst_4 [1] : vector<1x2x1xf32> to vector<1x1xf32>
    %8 = vector.shape_cast %7 : vector<1x1xf32> to vector<1x1x1xf32>
    %cst_5 = arith.constant 0.001953125 : f32
    %9 = vector.broadcast %cst_5 : f32 to vector<1x1x1xf32>
    %10 = arith.mulf %8, %9 : vector<1x1x1xf32>
    %cst_6 = arith.constant dense<0.000000e+00> : vector<1x1xf32>
    %11 = vector.multi_reduction <add>, %6, %cst_6 [1] : vector<1x2x1xf32> to vector<1x1xf32>
    %12 = vector.shape_cast %11 : vector<1x1xf32> to vector<1x1x1xf32>
    %cst_7 = arith.constant 0.001953125 : f32
    %13 = vector.broadcast %cst_7 : f32 to vector<1x1x1xf32>
    %14 = arith.mulf %12, %13 : vector<1x1x1xf32>
    %15 = arith.mulf %10, %10 : vector<1x1x1xf32>
    %16 = arith.subf %14, %15 : vector<1x1x1xf32>
    %cst_8 = arith.constant 0.000000e+00 : f32
    %17 = vector.broadcast %cst_8 : f32 to vector<1x1x1xf32>
    %18 = arith.maximumf %16, %17 : vector<1x1x1xf32>
    %cst_9 = arith.constant 9.99999974E-6 : f32
    %19 = vector.broadcast %cst_9 : f32 to vector<1x1x1xf32>
    %20 = arith.addf %18, %19 : vector<1x1x1xf32>
    %21 = math.rsqrt %20 : vector<1x1x1xf32>
    %c0_10 = arith.constant 0 : index
    %c0_11 = arith.constant 0 : index
    %c0_12 = arith.constant 0 : index
    %22 = vector.load %arg3[%c0_10, %c0_11, %c0_12] : memref<1x2x1xf32, #tpu.memory_space<vmem>>, vector<1x2x1xf32>
    %c0_13 = arith.constant 0 : index
    %c0_14 = arith.constant 0 : index
    %c0_15 = arith.constant 0 : index
    %23 = vector.load %arg4[%c0_13, %c0_14, %c0_15] : memref<1x2x1xf32, #tpu.memory_space<vmem>>, vector<1x2x1xf32>
    %24 = vector.broadcast %21 : vector<1x1x1xf32> to vector<1x2x1xf32>
    %25 = arith.mulf %24, %22 : vector<1x2x1xf32>
    %26 = vector.broadcast %10 : vector<1x1x1xf32> to vector<1x2x1xf32>
    %27 = arith.mulf %26, %25 : vector<1x2x1xf32>
    %28 = arith.subf %23, %27 : vector<1x2x1xf32>
    %29 = vector.broadcast %25 : vector<1x2x1xf32> to vector<1x2x256xf32>
    %30 = arith.mulf %1, %29 : vector<1x2x256xf32>
    %31 = vector.broadcast %28 : vector<1x2x1xf32> to vector<1x2x256xf32>
    %32 = arith.addf %30, %31 : vector<1x2x256xf32>
    %c0_16 = arith.constant 0 : index
    %c0_17 = arith.constant 0 : index
    %c0_18 = arith.constant 0 : index
    %c0_19 = arith.constant 0 : index
    %33 = vector.load %arg5[%c0_16, %c0_17, %c0_18, %c0_19] : memref<1x1x2x256xf32, #tpu.memory_space<vmem>>, vector<1x1x2x256xf32>
    %34 = vector.shape_cast %33 : vector<1x1x2x256xf32> to vector<1x2x256xf32>
    %35 = vector.shape_cast %32 : vector<1x2x256xf32> to vector<1x1x2x256xf32>
    tpu.vector_store %arg5[%c0_16, %c0_17, %c0_18, %c0_19], %35 {strides = array<i32>} : memref<1x1x2x256xf32, #tpu.memory_space<vmem>>, vector<1x1x2x256xf32>,
    return
  }
  func.func @transform_0(%arg0: i32, %arg1: i32) -> (i32, i32, i32, i32) {
    %c0_i32 = arith.constant 0 : i32
    %c0_i32_0 = arith.constant 0 : i32
    %c0_i32_1 = arith.constant 0 : i32
    return %arg0, %arg1, %c0_i32, %c0_i32_0 : i32, i32, i32, i32
  }
  func.func @transform_1(%arg0: i32, %arg1: i32) -> (i32, i32, i32) {
    %c0_i32 = arith.constant 0 : i32
    %c0_i32_0 = arith.constant 0 : i32
    %c0_i32_1 = arith.constant 0 : i32
    return %arg1, %c0_i32, %c0_i32_0 : i32, i32, i32
  }
  func.func @transform_2(%arg0: i32, %arg1: i32) -> (i32, i32, i32) {
    %c0_i32 = arith.constant 0 : i32
    %c0_i32_0 = arith.constant 0 : i32
    %c0_i32_1 = arith.constant 0 : i32
    return %arg1, %c0_i32, %c0_i32_0 : i32, i32, i32
  }
  func.func @transform_3(%arg0: i32, %arg1: i32) -> (i32, i32, i32, i32) {
    %c0_i32 = arith.constant 0 : i32
    %c0_i32_0 = arith.constant 0 : i32
    %c0_i32_1 = arith.constant 0 : i32
    return %arg0, %arg1, %c0_i32, %c0_i32_0 : i32, i32, i32, i32
  }
}

</mosaic_0001>

<llo_original>
// kernel: tpu_custom_call.1
$region0: #{tpu_custom_call.1}
  #allocation0 [shape = 'u32[]', space=smem, size = 0x4, offset = 0x4, fixed_abs, tag = 'smem constant byte address 0x4 - core index']
  #allocation1 [shape = 'u32[144,128]{1,0:T(1,128)}', space=vmem, size = 0x12000, scoped, tag = 'internal scratch']
  %s0 = inlined_call_operand.hbm [shape: f32[2,2,2,256], index: 0, kind: input, shape index: {}]
  %s1 = inlined_call_operand.vmem [shape: f32[2,2,1], index: 1, kind: input, shape index: {}]
  %s2 = inlined_call_operand.vmem [shape: f32[2,2,1], index: 2, kind: input, shape index: {}]
  %s3 = inlined_call_operand.hbm [shape: f32[2,2,2,256], index: 3, kind: output, shape index: {}]
  %s4 = sld [smem:[#allocation0]]
  $region49: #{tpu_custom_call.1} parent=0
    _
  %s6 = ssub.s32 1, %s4
  %s7 = scalar_select 0, %s6, %s4
  $region1: #{tpu_custom_call.1} parent=0
    #allocation2 [shape = 'u8[4096]{0}', space=vmem, size = 0x1000, scoped, tag = 'input window, operand 0']
    #allocation3 [shape = 's32[2]{0}', space=sflag, size = 0x8, scoped, tag = 'scoped memory for tpu_custom_call.1']
    #allocation4 [shape = 's32[2]{0}', space=sflag, size = 0x8, scoped, tag = 'scoped memory for tpu_custom_call.1']
    #allocation5 [shape = 'u8[4096]{0}', space=vmem, size = 0x1000, scoped, tag = 'output window, operand 0']
    %8 = vsyncpa [#allocation3], 0
    %s9 = scalar_lea.sflag [#allocation3], 1
    %10 = vsyncpa %s9, 0
    %11 = vsyncpa [#allocation4], 0
    %s12 = scalar_lea.sflag [#allocation4], 1
    %13 = vsyncpa %s12, 0
    loop: start=0, step=1, limit=6
    $region2: #{tpu_custom_call.1} parent=1 // loop_pre_header
      _
    $region3: #{tpu_custom_call.1} parent=1 // loop_header
      %s15 = sphi 0, %s19
      %p16 = scmp.ge.s32.totalorder %s15, 6
      %s22 = sphi 0, %s34
      %s23 = sphi 0, %s30
      %s24 = sphi 0, %s22
      %s25 = sphi 0, %s23
      %s26 = sphi 0, %s24
      %s27 = sphi 0, %s25
      %s39 = sphi 0, %s41
      %s42 = sphi 0, %s39
      %s43 = sphi 0, %s42
      %s59 = sphi 0, %s43
      %s65 = sphi 0, %s67
      %s68 = sphi 0, %s65
      %s69 = sphi 0, %s68
      %s85 = sphi 0, %s69
      %s91 = sphi 0, %s93
      %s94 = sphi 0, %s91
      %s95 = sphi 0, %s94
      %s111 = sphi 0, %s95
      %s119 = sphi 0, %s121
      %s122 = sphi 0, %s119
      %s123 = sphi 0, %s122
      %s139 = sphi 0, %s123
    $region4: #{tpu_custom_call.1} parent=1 // loop_header_branch
      %18 = sbr.rel (%p16) target = $region8
    $region5: #{tpu_custom_call.1} parent=1 // loop_body
      %s20 = ssub.s32 %s15, 1
      %s21 = ssub.s32 %s15, 2
      %s28 = sadd.s32 1, %s23
      %p29 = scmp.ge.s32.totalorder %s28, 2
      %s30 = scalar_select %p29, 0, %s28
      %s31 = sadd.s32 1, %s22
      %s32 = scalar_select %p29, %s31, %s22
      %p33 = scmp.ge.s32.totalorder %s32, 2
      %s34 = scalar_select %p33, 0, %s32
      %s35 = ssub.s32 %s22, %s34
      %s36 = ssub.s32 %s23, %s30
      %s37 = sor.u32 %s35, %s36
      %p38 = scmp.eq.s32.totalorder %s37, 0
      %s40 = sadd.s32 %s39, 1
      %s41 = scalar_select %p38, %s39, %s40
      %p44 = pneg %p38
      %p45 = scmp.eq.s32.totalorder %s15, 3
      %p46 = por %p44, %p45
      %p47 = scmp.ne.s32.totalorder %s39, %s42
      %p48 = scmp.eq.s32.totalorder %s15, 0
      %p49 = por %p47, %p48
      %p50 = scmp.ne.s32.totalorder %s39, %s42
      %p51 = scmp.eq.s32.totalorder %s20, 3
      %p52 = por %p50, %p51
      %p53 = scmp.ne.s32.totalorder %s42, %s43
      %p54 = scmp.eq.s32.totalorder %s20, 0
      %p55 = por %p53, %p54
      %p56 = scmp.ne.s32.totalorder %s42, %s43
      %p57 = scmp.eq.s32.totalorder %s21, 3
      %p58 = por %p56, %p57
      %p60 = scmp.ne.s32.totalorder %s43, %s59
      %p61 = scmp.eq.s32.totalorder %s21, 0
      %p62 = por %p60, %p61
      %s63 = ssub.s32 %s23, %s30
      %p64 = scmp.eq.s32.totalorder %s63, 0
      %s66 = sadd.s32 %s65, 1
      %s67 = scalar_select %p64, %s65, %s66
      %p70 = pneg %p64
      %p71 = scmp.eq.s32.totalorder %s15, 3
      %p72 = por %p70, %p71
      %p73 = scmp.ne.s32.totalorder %s65, %s68
      %p74 = scmp.eq.s32.totalorder %s15, 0
      %p75 = por %p73, %p74
      %p76 = scmp.ne.s32.totalorder %s65, %s68
      %p77 = scmp.eq.s32.totalorder %s20, 3
      %p78 = por %p76, %p77
      %p79 = scmp.ne.s32.totalorder %s68, %s69
      %p80 = scmp.eq.s32.totalorder %s20, 0
      %p81 = por %p79, %p80
      %p82 = scmp.ne.s32.totalorder %s68, %s69
      %p83 = scmp.eq.s32.totalorder %s21, 3
      %p84 = por %p82, %p83
      %p86 = scmp.ne.s32.totalorder %s69, %s85
      %p87 = scmp.eq.s32.totalorder %s21, 0
      %p88 = por %p86, %p87
      %s89 = ssub.s32 %s23, %s30
      %p90 = scmp.eq.s32.totalorder %s89, 0
      %s92 = sadd.s32 %s91, 1
      %s93 = scalar_select %p90, %s91, %s92
      %p96 = pneg %p90
      %p97 = scmp.eq.s32.totalorder %s15, 3
      %p98 = por %p96, %p97
      %p99 = scmp.ne.s32.totalorder %s91, %s94
      %p100 = scmp.eq.s32.totalorder %s15, 0
      %p101 = por %p99, %p100
      %p102 = scmp.ne.s32.totalorder %s91, %s94
      %p103 = scmp.eq.s32.totalorder %s20, 3
      %p104 = por %p102, %p103
      %p105 = scmp.ne.s32.totalorder %s94, %s95
      %p106 = scmp.eq.s32.totalorder %s20, 0
      %p107 = por %p105, %p106
      %p108 = scmp.ne.s32.totalorder %s94, %s95
      %p109 = scmp.eq.s32.totalorder %s21, 3
      %p110 = por %p108, %p109
      %p112 = scmp.ne.s32.totalorder %s95, %s111
      %p113 = scmp.eq.s32.totalorder %s21, 0
      %p114 = por %p112, %p113
      %s115 = ssub.s32 %s22, %s34
      %s116 = ssub.s32 %s23, %s30
      %s117 = sor.u32 %s115, %s116
      %p118 = scmp.eq.s32.totalorder %s117, 0
      %s120 = sadd.s32 %s119, 1
      %s121 = scalar_select %p118, %s119, %s120
      %p124 = pneg %p118
      %p125 = scmp.eq.s32.totalorder %s15, 3
      %p126 = por %p124, %p125
      %p127 = scmp.ne.s32.totalorder %s119, %s122
      %p128 = scmp.eq.s32.totalorder %s15, 0
      %p129 = por %p127, %p128
      %p130 = scmp.ne.s32.totalorder %s119, %s122
      %p131 = scmp.eq.s32.totalorder %s20, 3
      %p132 = por %p130, %p131
      %p133 = scmp.ne.s32.totalorder %s122, %s123
      %p134 = scmp.eq.s32.totalorder %s20, 0
      %p135 = por %p133, %p134
      %p136 = scmp.ne.s32.totalorder %s122, %s123
      %p137 = scmp.eq.s32.totalorder %s21, 3
      %p138 = por %p136, %p137
      %p140 = scmp.ne.s32.totalorder %s123, %s139
      %p141 = scmp.eq.s32.totalorder %s21, 0
      %p142 = por %p140, %p141
      %p143 = scmp.le.s32.totalorder 1, %s15
      %p144 = scmp.lt.s32.totalorder %s15, 5
      %p145 = pnand %p143, %p144
      %p146 = pneg %p145
      // Predicated region
      $region9: #{tpu_custom_call.1} parent=5 // pred_check
        _
      $region10: #{tpu_custom_call.1} parent=5 // pred_check_branch
        %148 = sbr.rel (%p145) target = $region12
      $region11: #{tpu_custom_call.1} parent=5 // pred_region
        %s149 = ssub.s32 %s15, 1
      $region12: #{tpu_custom_call.1} parent=5 // pred_fallthru
        _
      %p150 = scmp.lt.s32.totalorder %s15, 4
      // Predicated region
      $region13: #{tpu_custom_call.1} parent=5 // pred_check
        %p151 = pneg %p150
      $region14: #{tpu_custom_call.1} parent=5 // pred_check_branch
        %153 = sbr.rel (%p151) target = $region16
      $region15: #{tpu_custom_call.1} parent=5 // pred_region
        // Predicated region
        $region17: #{tpu_custom_call.1} parent=15 // pred_check
          %p154 = pneg %p49
        $region18: #{tpu_custom_call.1} parent=15 // pred_check_branch
          %156 = sbr.rel (%p154) target = $region20
        $region19: #{tpu_custom_call.1} parent=15 // pred_region
          %s157 = sand.u32 %s39, 1
          %s158 = scalar_lea.sflag [#allocation3], %s157
          %s159 = sand.u32 %s39, 1
          %s160 = smul.addr %s159, 4
          %s161 = scalar_lea.vmem [#allocation2], %s160
          %s163 = ssub.s32 64, 64
          %164 = vsyncadd %s158, %s163
          %s165 = smul.addr %s23, 2
          %s166 = smul.addr %s22, 4
          %s167 = sadd.s32 %s165, %s166
          %s168 = smul.addr %s167, 32
          %s169 = scalar_lea.hbm %s0, %s168
          %s171 = sshll.u32 %s161, 4
          %s172 = int_to_ptr.vmem [resolvable:$true] %s171
          %174 = dma.hbm_to_vmem [thread:$0]  %s169, 64, %s172, %s158
        $region20: #{tpu_custom_call.1} parent=15 // pred_fallthru
          _
        // Predicated region
        $region21: #{tpu_custom_call.1} parent=15 // pred_check
          %p175 = pneg %p75
        $region22: #{tpu_custom_call.1} parent=15 // pred_check_branch
          %177 = sbr.rel (%p175) target = $region24
        $region23: #{tpu_custom_call.1} parent=15 // pred_region
          %p178 = scmp.lt.s32.totalorder %s23, 1
          %s179 = scalar_select %p178, %s23, 1
          %s180 = smul.addr %s179, 2
          %s181 = scalar_lea.vmem %s1, %s180
        $region24: #{tpu_custom_call.1} parent=15 // pred_fallthru
          _
        // Predicated region
        $region25: #{tpu_custom_call.1} parent=15 // pred_check
          %p182 = pneg %p101
        $region26: #{tpu_custom_call.1} parent=15 // pred_check_branch
          %184 = sbr.rel (%p182) target = $region28
        $region27: #{tpu_custom_call.1} parent=15 // pred_region
          %p185 = scmp.lt.s32.totalorder %s23, 1
          %s186 = scalar_select %p185, %s23, 1
          %s187 = smul.addr %s186, 2
          %s188 = scalar_lea.vmem %s2, %s187
        $region28: #{tpu_custom_call.1} parent=15 // pred_fallthru
          _
      $region16: #{tpu_custom_call.1} parent=5 // pred_fallthru
        _
      %p189 = scmp.le.s32.totalorder 1, %s15
      %p190 = scmp.lt.s32.totalorder %s15, 5
      %p191 = pnand %p189, %p190
      %p192 = pneg %p191
      // Predicated region
      $region29: #{tpu_custom_call.1} parent=5 // pred_check
        _
      $region30: #{tpu_custom_call.1} parent=5 // pred_check_branch
        %194 = sbr.rel (%p191) target = $region32
      $region31: #{tpu_custom_call.1} parent=5 // pred_region
        %s195 = ssub.s32 %s15, 1
        %s196 = sand.u32 %s42, 1
        %s197 = scalar_lea.sflag [#allocation3], %s196
        %s198 = sand.u32 %s42, 1
        %s199 = smul.addr %s198, 4
        %s200 = scalar_lea.vmem [#allocation2], %s199
        // Predicated region
        $region33: #{tpu_custom_call.1} parent=31 // pred_check
          %p201 = pneg %p55
        $region34: #{tpu_custom_call.1} parent=31 // pred_check_branch
          %203 = sbr.rel (%p201) target = $region36
        $region35: #{tpu_custom_call.1} parent=31 // pred_region
          %204 = dma.done %s197, 64
        $region36: #{tpu_custom_call.1} parent=31 // pred_fallthru
          _
        %s205 = sand.u32 %s42, 1
        %s206 = scalar_lea.sflag [#allocation3], %s205
        %s207 = sand.u32 %s42, 1
        %s208 = smul.addr %s207, 4
        %s209 = scalar_lea.vmem [#allocation2], %s208
        %p210 = pneg %p55
        %p211 = pneg %p52
        %p212 = scmp.lt.s32.totalorder %s25, 1
        %s213 = scalar_select %p212, %s25, 1
        %s214 = smul.addr %s213, 2
        %s215 = scalar_lea.vmem %s1, %s214
        %p216 = pneg %p81
        %p217 = pneg %p78
        %p218 = scmp.lt.s32.totalorder %s25, 1
        %s219 = scalar_select %p218, %s25, 1
        %s220 = smul.addr %s219, 2
        %s221 = scalar_lea.vmem %s2, %s220
        %p222 = pneg %p107
        %p223 = pneg %p104
        %p224 = pneg %p135
        %p225 = pneg %p132
        %s226 = sand.u32 %s122, 1
        %s227 = scalar_lea.sflag [#allocation4], %s226
        %s228 = sand.u32 %s122, 1
        %s229 = smul.addr %s228, 4
        %s230 = scalar_lea.vmem [#allocation5], %s229
        %p231 = scmp.lt.s32.totalorder %s25, 1
        %s232 = scalar_select %p231, %s25, 1
        %s233 = smul.addr %s232, 2
        %s234 = scalar_lea.vmem %s1, %s233
        %p235 = scmp.lt.s32.totalorder %s25, 1
        %s236 = scalar_select %p235, %s25, 1
        %s237 = smul.addr %s236, 2
        %s238 = scalar_lea.vmem %s2, %s237
        %v239 = vld [vmem:[%s200] sm:$0xf]
        %v242 = vunpack.c.l.s4 1983009808
        %v243 = vunpack.c.0.s8 %v242
        %v244 = vlaneseq
        %v245 = vshrl.u32 %v244, 7
        %v246 = vsub.s32 %v243, %v245
        %v247 = vrot.slane %v239, %v246
        %v248 = vcombine.high %v247, %v247
        %vm251 = vcmask 1041408
        %v252 = vsel %vm251, %v247, 0.0
        %v253 = vsel %vm251, %v248, 0.0
        %v254 = vadd.f32 %v252, %v253
        %255 = vadd.xlane.f32.xlu0 %v254
        %v256 = vpop.xlane.xlu0 %255
        %v257 = vmul.f32 %v239, %v239
        %v260 = vunpack.c.l.s4 1983009808
        %v261 = vunpack.c.0.s8 %v260
        %v262 = vlaneseq
        %v263 = vshrl.u32 %v262, 7
        %v264 = vsub.s32 %v261, %v263
        %v265 = vrot.slane %v257, %v264
        %v266 = vcombine.high %v265, %v265
        %v269 = vsel %vm251, %v265, 0.0
        %v270 = vsel %vm251, %v266, 0.0
        %v271 = vadd.f32 %v269, %v270
        %272 = vadd.xlane.f32.xlu0 %v271
        %v273 = vpop.xlane.xlu0 %272
        %v274 = vsel %vm251, %v256, 0.0
        %v275 = vrot.slane %v274, 4
        %v276 = vadd.f32 %v274, %v275
        %v277 = vrot.slane %v276, 2
        %v278 = vadd.f32 %v276, %v277
        %v279 = vrot.slane %v278, 1
        %v280 = vadd.f32 %v278, %v279
        %v281 = vmul.f32 %v280, 0.001953125
        %v282 = vsel %vm251, %v273, 0.0
        %v283 = vrot.slane %v282, 4
        %v284 = vadd.f32 %v282, %v283
        %v285 = vrot.slane %v284, 2
        %v286 = vadd.f32 %v284, %v285
        %v287 = vrot.slane %v286, 1
        %v288 = vadd.f32 %v286, %v287
        %v289 = vmul.f32 %v288, 0.001953125
        %v290 = vmul.f32 %v281, %v281
        %v291 = vsub.f32 %v289, %v290
        %v292 = vmax.f32 %v291, 0.0
        %v293 = vadd.f32 %v292, 1e-05
        %v294 = vrsqrt.pop %v293
        %v295 = vld [vmem:[%s234] sm:$0x3]
        %v296 = vld [vmem:[%s238] sm:$0x3]
        %v297 = vmul.f32 %v294, %v295
        %v298 = vmul.f32 %v281, %v297
        %v299 = vsub.f32 %v296, %v298
        %301 = vset.pattern.permute.xlu0 0
        %302 = vperm.xlu0 %301, %v297
        %v303 = vpop.permute.xlu0 %302
        %v305 = vunpack.c.l.s4 269488144
        %v306 = vunpack.c.0.s8 %v305
        %v307 = vlaneseq
        %v308 = vshrl.u32 %v307, 7
        %v309 = vsub.s32 %v306, %v308
        %v310 = vrot.slane %v303, %v309
        %v312 = vmul.f32 %v239, %v310
        %314 = vset.pattern.permute.xlu0 0
        %315 = vperm.xlu0 %314, %v299
        %v316 = vpop.permute.xlu0 %315
        %v318 = vunpack.c.l.s4 269488144
        %v319 = vunpack.c.0.s8 %v318
        %v320 = vlaneseq
        %v321 = vshrl.u32 %v320, 7
        %v322 = vsub.s32 %v319, %v321
        %v323 = vrot.slane %v316, %v322
        %v325 = vadd.f32 %v312, %v323
        %326 = vst [vmem:[%s230] sm:$0xf] %v325
        %s327 = sand.u32 %s122, 1
        %s328 = scalar_lea.sflag [#allocation4], %s327
        %s329 = sand.u32 %s122, 1
        %s330 = smul.addr %s329, 4
        %s331 = scalar_lea.vmem [#allocation5], %s330
        // Predicated region
        $region37: #{tpu_custom_call.1} parent=31 // pred_check
          %p332 = pneg %p132
        $region38: #{tpu_custom_call.1} parent=31 // pred_check_branch
          %334 = sbr.rel (%p332) target = $region40
        $region39: #{tpu_custom_call.1} parent=31 // pred_region
          %s336 = ssub.s32 64, 64
          %337 = vsyncadd %s328, %s336
          %s338 = smul.addr %s25, 2
          %s339 = smul.addr %s24, 4
          %s340 = sadd.s32 %s338, %s339
          %s341 = smul.addr %s340, 32
          %s342 = scalar_lea.hbm %s3, %s341
          %s344 = sshll.u32 %s331, 4
          %s345 = int_to_ptr.vmem [resolvable:$true] %s344
          %347 = dma.vmem_to_hbm [thread:$0]  %s345, 64, %s342, %s328
        $region40: #{tpu_custom_call.1} parent=31 // pred_fallthru
          _
      $region32: #{tpu_custom_call.1} parent=5 // pred_fallthru
        _
      %p348 = scmp.le.s32.totalorder 2, %s15
      // Predicated region
      $region41: #{tpu_custom_call.1} parent=5 // pred_check
        %p349 = pneg %p348
      $region42: #{tpu_custom_call.1} parent=5 // pred_check_branch
        %351 = sbr.rel (%p349) target = $region44
      $region43: #{tpu_custom_call.1} parent=5 // pred_region
        %s352 = ssub.s32 %s15, 2
        // Predicated region
        $region45: #{tpu_custom_call.1} parent=43 // pred_check
          %p353 = pneg %p138
        $region46: #{tpu_custom_call.1} parent=43 // pred_check_branch
          %355 = sbr.rel (%p353) target = $region48
        $region47: #{tpu_custom_call.1} parent=43 // pred_region
          %s356 = sand.u32 %s123, 1
          %s357 = scalar_lea.sflag [#allocation4], %s356
          %s358 = sand.u32 %s123, 1
          %s359 = smul.addr %s358, 4
          %s360 = scalar_lea.vmem [#allocation5], %s359
          %361 = dma.done %s357, 64
        $region48: #{tpu_custom_call.1} parent=43 // pred_fallthru
          _
      $region44: #{tpu_custom_call.1} parent=5 // pred_fallthru
        _
    $region6: #{tpu_custom_call.1} parent=1 // loop_footer
      %s19 = sadd.s32 1, %s15
    $region7: #{tpu_custom_call.1} parent=1 // loop_footer_branch
      %14 = sbr.rel target = $region3
    $region8: #{tpu_custom_call.1} parent=1 // loop_exit
      _
    %362 = vsyncpa [#allocation3], 1
    %s363 = scalar_lea.sflag [#allocation3], 1
    %364 = vsyncpa %s363, 1
    %365 = vsyncpa [#allocation4], 1
    %s366 = scalar_lea.sflag [#allocation4], 1
    %367 = vsyncpa %s366, 1

</llo_original>
